<compile_context>
chip_gen: v7x
topology: tpu7x:2x2x1
jax: 0.10.0
libtpu: 0.0.40
codegen_flags: <defaults>
</compile_context>

<pallas_src>
import jax
import jax.numpy as jnp
from jax.experimental import pallas as pl
from jax.experimental.pallas import tpu as pltpu

_LANES = 128
_SMALL_INPUT_BYTES = 256 * 1024  # below this, plain XLA elementwise log wins


def _make_log_kernel(epsilon: float, out_dtype):
    epsilon = float(epsilon)  # Python literal -> folded into the op, no captured const

    def _log_kernel(x_ref, o_ref):
        # Compute in f32 (exact for f32 inputs, avoids the missing bf16 EUP path on
        # v5e); the adds/casts are free filler on this HBM-bound kernel.
        x = x_ref[...].astype(jnp.float32)
        o_ref[...] = jnp.log(x + epsilon).astype(out_dtype)

    return _log_kernel


def _block_budget():
    """Return (block_bytes, vmem_limit_bytes) tuned per TPU generation."""
    vmem = None
    try:
        vmem = getattr(pltpu.get_tpu_info(), "vmem_capacity_bytes", None)
    except Exception:  # not on TPU / interpret mode: fall back to safe defaults
        vmem = None
    if vmem is None:
        return 4 * 1024 * 1024, 32 * 1024 * 1024          # conservative default
    if vmem >= 96 * 1024 * 1024:                          # v5e / v6e: 128 MiB VMEM
        return 8 * 1024 * 1024, 64 * 1024 * 1024
    return 6 * 1024 * 1024, 40 * 1024 * 1024              # v7x-class: 64 MiB VMEM


def log_activation(x: jax.Array, epsilon: float = 1e-6) -> jax.Array:
    """y = log(x + epsilon), elementwise, same shape/dtype as x."""
    orig_shape = x.shape
    dtype = x.dtype
    n = x.size
    itemsize = jnp.dtype(dtype).itemsize
    epsilon = float(epsilon)

    # Small-input fallback: pallas_call fixed cost would dominate; let XLA fuse it.
    if n == 0 or n * itemsize < _SMALL_INPUT_BYTES:
        return jnp.log(x.astype(jnp.float32) + epsilon).astype(dtype)

    # Sublane packing: 8 rows/vreg for 32-bit, 16 for 16-bit, 32 for 8-bit dtypes.
    packing = max(1, 4 // itemsize)
    min_rows = 8 * packing

    block_bytes, vmem_limit = _block_budget()
    target_rows = max(min_rows,
                      (block_bytes // (_LANES * itemsize)) // min_rows * min_rows)

    rows = pl.cdiv(n, _LANES)
    # Cap block height at ~half the rows (rounded up to a packed vreg tile) so the
    # grid always has >= 2 steps -> "parallel" axis can shard across both TCs (v7x).
    half_rows = pl.cdiv(pl.cdiv(rows, 2), min_rows) * min_rows
    block_rows = max(min_rows, min(target_rows, half_rows))

    padded = (n % _LANES) != 0
    if padded:
        # Pad only to the next lane row (<= 127 elements); constant 1 -> finite log,
        # sliced off below. allow_input_fusion lets XLA fuse this pad into the operand.
        n_pad = rows * _LANES
        x2d = jnp.pad(jnp.ravel(x), (0, n_pad - n),
                      constant_values=1).reshape(rows, _LANES)
    else:
        # Zero-copy: pure relabeling of the contiguous buffer.
        x2d = x.reshape(rows, _LANES)

    grid = (pl.cdiv(rows, block_rows),)   # partial final block handled by masked DMA
    kernel = _make_log_kernel(epsilon, dtype)

    out2d = pl.pallas_call(
        kernel,
        out_shape=jax.ShapeDtypeStruct((rows, _LANES), dtype),
        grid_spec=pltpu.PrefetchScalarGridSpec(
            num_scalar_prefetch=0,
            grid=grid,
            in_specs=[pl.BlockSpec((block_rows, _LANES), lambda i: (i, 0))],
            out_specs=pl.BlockSpec((block_rows, _LANES), lambda i: (i, 0)),
        ),
        compiler_params=pltpu.CompilerParams(
            dimension_semantics=("parallel",),      # shard grid across TCs on v7x
            vmem_limit_bytes=vmem_limit,
            allow_input_fusion=[True] if padded else None,
        ),
        cost_estimate=pl.CostEstimate(
            flops=n, transcendentals=n, bytes_accessed=2 * n * itemsize),
    )(x2d)

    if padded:
        return out2d.reshape(-1)[:n].reshape(orig_shape)
    return out2d.reshape(orig_shape)


if __name__ == "__main__":
    key = jax.random.PRNGKey(0)
    eps = 1e-6
    k0, k1, k2, k3 = jax.random.split(key, 4)

    # 1) Canonical small braindecode-style NCHW input (XLA fallback path).
    x_small = jax.random.uniform(k0, (2, 4, 16, 16), dtype=jnp.float32)
    y_small = log_activation(x_small, eps)
    jax.block_until_ready(y_small)
    assert y_small.shape == x_small.shape and y_small.dtype == x_small.dtype
    assert jnp.allclose(y_small, jnp.log(x_small + eps), atol=1e-5, rtol=1e-5)

    # 2) Lane-aligned input -> Pallas zero-copy fast path, 2-block grid.
    x_mid = jax.random.uniform(k1, (2, 4, 96, 128), dtype=jnp.float32)
    y_mid = log_activation(x_mid, eps)
    jax.block_until_ready(y_mid)
    assert y_mid.shape == x_mid.shape and y_mid.dtype == x_mid.dtype
    assert jnp.allclose(y_mid, jnp.log(x_mid + eps), atol=1e-5, rtol=1e-5)

    # 3) Larger input exercising the multi-block streaming path.
    x_big = jax.random.uniform(k2, (8, 32, 64, 64), dtype=jnp.float32)
    y_big = log_activation(x_big, eps)
    jax.block_until_ready(y_big)
    assert y_big.shape == x_big.shape and y_big.dtype == x_big.dtype
    assert jnp.allclose(y_big, jnp.log(x_big + eps), atol=1e-5, rtol=1e-5)

    # 4) Ragged element count -> minimally padded path with a partial final block.
    x_rag = jax.random.uniform(k3, (3, 5, 67, 71), dtype=jnp.float32)
    y_rag = log_activation(x_rag, eps)
    jax.block_until_ready(y_rag)
    assert y_rag.shape == x_rag.shape and y_rag.dtype == x_rag.dtype
    assert jnp.allclose(y_rag, jnp.log(x_rag + eps), atol=1e-5, rtol=1e-5)

    print("KERNEL_OK")
</pallas_src>

<mosaic_0001>
module attributes {stable_mosaic.version = 11 : i64} {
  func.func @_log_kernel(%arg0: i32, %arg1: memref<384x128xf32, #tpu.memory_space<vmem>>, %arg2: memref<384x128xf32, #tpu.memory_space<vmem>>) attributes {dimension_semantics = [#tpu.dimension_semantics<parallel>], iteration_bounds = array<i64: 2>, scalar_prefetch = 0 : i64, scratch_operands = 0 : i64, tpu.core_type = #tpu.core_type<tc>, window_params = [{transform_indices = @transform_0, window_bounds = array<i64: 384, 128>}, {transform_indices = @transform_1, window_bounds = array<i64: 384, 128>}]} {
    %c0 = arith.constant 0 : index
    %c0_0 = arith.constant 0 : index
    %0 = vector.load %arg1[%c0, %c0_0] : memref<384x128xf32, #tpu.memory_space<vmem>>, vector<384x128xf32>
    %cst = arith.constant 9.99999997E-7 : f32
    %1 = vector.broadcast %cst : f32 to vector<384x128xf32>
    %2 = arith.addf %0, %1 : vector<384x128xf32>
    %3 = math.log %2 : vector<384x128xf32>
    %c0_1 = arith.constant 0 : index
    %c0_2 = arith.constant 0 : index
    %4 = vector.load %arg2[%c0_1, %c0_2] : memref<384x128xf32, #tpu.memory_space<vmem>>, vector<384x128xf32>
    tpu.vector_store %arg2[%c0_1, %c0_2], %3 {strides = array<i32>} : memref<384x128xf32, #tpu.memory_space<vmem>>, vector<384x128xf32>,
    return
  }
  func.func @transform_0(%arg0: i32) -> (i32, i32) {
    %c0_i32 = arith.constant 0 : i32
    %c0_i32_0 = arith.constant 0 : i32
    return %arg0, %c0_i32 : i32, i32
  }
  func.func @transform_1(%arg0: i32) -> (i32, i32) {
    %c0_i32 = arith.constant 0 : i32
    %c0_i32_0 = arith.constant 0 : i32
    return %arg0, %c0_i32 : i32, i32
  }
}

</mosaic_0001>

<llo_original>
// kernel: tpu_custom_call.1
$region0: #{tpu_custom_call.1}
  #allocation0 [shape = 'u32[]', space=smem, size = 0x4, offset = 0x4, fixed_abs, tag = 'smem constant byte address 0x4 - core index']
  #allocation1 [shape = 'u32[144,128]{1,0:T(1,128)}', space=vmem, size = 0x12000, scoped, tag = 'internal scratch']
  %s0 = inlined_call_operand.hbm [shape: f32[768,128], index: 0, kind: input, shape index: {}]
  %s1 = inlined_call_operand.hbm [shape: f32[768,128], index: 1, kind: output, shape index: {}]
  %s2 = sld [smem:[#allocation0]]
  $region41: #{tpu_custom_call.1} parent=0
    _
  %s4 = ssub.s32 1, %s2
  %s5 = scalar_select 0, %s4, %s2
  $region1: #{tpu_custom_call.1} parent=0
    #allocation2 [shape = 'u8[393216]{0}', space=vmem, size = 0x60000, scoped, tag = 'input window, operand 0']
    #allocation3 [shape = 's32[2]{0}', space=sflag, size = 0x8, scoped, tag = 'scoped memory for tpu_custom_call.1']
    #allocation4 [shape = 's32[2]{0}', space=sflag, size = 0x8, scoped, tag = 'scoped memory for tpu_custom_call.1']
    #allocation5 [shape = 'u8[393216]{0}', space=vmem, size = 0x60000, scoped, tag = 'output window, operand 0']
    %6 = vsyncpa [#allocation3], 0
    %s7 = scalar_lea.sflag [#allocation3], 1
    %8 = vsyncpa %s7, 0
    %9 = vsyncpa [#allocation4], 0
    %s10 = scalar_lea.sflag [#allocation4], 1
    %11 = vsyncpa %s10, 0
    loop: start=0, step=1, limit=4
    $region2: #{tpu_custom_call.1} parent=1 // loop_pre_header
      _
    $region3: #{tpu_custom_call.1} parent=1 // loop_header
      %s13 = sphi 0, %s17
      %p14 = scmp.ge.s32.totalorder %s13, 4
      %s23 = sphi 0, %s25
      %s26 = sphi 0, %s23
      %s27 = sphi 0, %s26
      %s43 = sphi 0, %s27
      %s49 = sphi 0, %s51
      %s52 = sphi 0, %s49
      %s53 = sphi 0, %s52
      %s69 = sphi 0, %s53
    $region4: #{tpu_custom_call.1} parent=1 // loop_header_branch
      %16 = sbr.rel (%p14) target = $region8
    $region5: #{tpu_custom_call.1} parent=1 // loop_body
      %s18 = ssub.s32 %s13, 1
      %s19 = ssub.s32 %s13, 2
      %s20 = sadd.s32 %s13, 1
      %s21 = ssub.s32 %s13, %s20
      %p22 = scmp.eq.s32.totalorder %s21, 0
      %s24 = sadd.s32 %s23, 1
      %s25 = scalar_select %p22, %s23, %s24
      %p28 = pneg %p22
      %p29 = scmp.eq.s32.totalorder %s13, 1
      %p30 = por %p28, %p29
      %p31 = scmp.ne.s32.totalorder %s23, %s26
      %p32 = scmp.eq.s32.totalorder %s13, 0
      %p33 = por %p31, %p32
      %p34 = scmp.ne.s32.totalorder %s23, %s26
      %p35 = scmp.eq.s32.totalorder %s18, 1
      %p36 = por %p34, %p35
      %p37 = scmp.ne.s32.totalorder %s26, %s27
      %p38 = scmp.eq.s32.totalorder %s18, 0
      %p39 = por %p37, %p38
      %p40 = scmp.ne.s32.totalorder %s26, %s27
      %p41 = scmp.eq.s32.totalorder %s19, 1
      %p42 = por %p40, %p41
      %p44 = scmp.ne.s32.totalorder %s27, %s43
      %p45 = scmp.eq.s32.totalorder %s19, 0
      %p46 = por %p44, %p45
      %s47 = ssub.s32 %s13, %s20
      %p48 = scmp.eq.s32.totalorder %s47, 0
      %s50 = sadd.s32 %s49, 1
      %s51 = scalar_select %p48, %s49, %s50
      %p54 = pneg %p48
      %p55 = scmp.eq.s32.totalorder %s13, 1
      %p56 = por %p54, %p55
      %p57 = scmp.ne.s32.totalorder %s49, %s52
      %p58 = scmp.eq.s32.totalorder %s13, 0
      %p59 = por %p57, %p58
      %p60 = scmp.ne.s32.totalorder %s49, %s52
      %p61 = scmp.eq.s32.totalorder %s18, 1
      %p62 = por %p60, %p61
      %p63 = scmp.ne.s32.totalorder %s52, %s53
      %p64 = scmp.eq.s32.totalorder %s18, 0
      %p65 = por %p63, %p64
      %p66 = scmp.ne.s32.totalorder %s52, %s53
      %p67 = scmp.eq.s32.totalorder %s19, 1
      %p68 = por %p66, %p67
      %p70 = scmp.ne.s32.totalorder %s53, %s69
      %p71 = scmp.eq.s32.totalorder %s19, 0
      %p72 = por %p70, %p71
      %p73 = scmp.le.s32.totalorder 1, %s13
      %p74 = scmp.lt.s32.totalorder %s13, 3
      %p75 = pnand %p73, %p74
      %p76 = pneg %p75
      // Predicated region
      $region9: #{tpu_custom_call.1} parent=5 // pred_check
        _
      $region10: #{tpu_custom_call.1} parent=5 // pred_check_branch
        %78 = sbr.rel (%p75) target = $region12
      $region11: #{tpu_custom_call.1} parent=5 // pred_region
        %s79 = ssub.s32 %s13, 1
      $region12: #{tpu_custom_call.1} parent=5 // pred_fallthru
        _
      %p80 = scmp.lt.s32.totalorder %s13, 2
      // Predicated region
      $region13: #{tpu_custom_call.1} parent=5 // pred_check
        %p81 = pneg %p80
      $region14: #{tpu_custom_call.1} parent=5 // pred_check_branch
        %83 = sbr.rel (%p81) target = $region16
      $region15: #{tpu_custom_call.1} parent=5 // pred_region
        // Predicated region
        $region17: #{tpu_custom_call.1} parent=15 // pred_check
          %p84 = pneg %p33
        $region18: #{tpu_custom_call.1} parent=15 // pred_check_branch
          %86 = sbr.rel (%p84) target = $region20
        $region19: #{tpu_custom_call.1} parent=15 // pred_region
          %s87 = sand.u32 %s23, 1
          %s88 = scalar_lea.sflag [#allocation3], %s87
          %s89 = sand.u32 %s23, 1
          %s90 = smul.addr %s89, 384
          %s91 = scalar_lea.vmem [#allocation2], %s90
          %s92 = smul.u32 48, %s13
          %s94 = ssub.s32 6144, 6144
          %95 = vsyncadd %s88, %s94
          %s96 = smul.addr %s92, 128
          %s97 = scalar_lea.hbm %s0, %s96
          %s98 = sshll.u32 %s91, 4
          %s99 = int_to_ptr.vmem [resolvable:$true] %s98
          %104 = dma.hbm_to_vmem [thread:$0]  %s97, 6144, %s99, %s88, 128, 128, 8
        $region20: #{tpu_custom_call.1} parent=15 // pred_fallthru
          _
      $region16: #{tpu_custom_call.1} parent=5 // pred_fallthru
        _
      %p105 = scmp.le.s32.totalorder 1, %s13
      %p106 = scmp.lt.s32.totalorder %s13, 3
      %p107 = pnand %p105, %p106
      %p108 = pneg %p107
      // Predicated region
      $region21: #{tpu_custom_call.1} parent=5 // pred_check
        _
      $region22: #{tpu_custom_call.1} parent=5 // pred_check_branch
        %110 = sbr.rel (%p107) target = $region24
      $region23: #{tpu_custom_call.1} parent=5 // pred_region
        %s111 = ssub.s32 %s13, 1
        %s112 = sand.u32 %s26, 1
        %s113 = scalar_lea.sflag [#allocation3], %s112
        %s114 = sand.u32 %s26, 1
        %s115 = smul.addr %s114, 384
        %s116 = scalar_lea.vmem [#allocation2], %s115
        // Predicated region
        $region25: #{tpu_custom_call.1} parent=23 // pred_check
          %p117 = pneg %p39
        $region26: #{tpu_custom_call.1} parent=23 // pred_check_branch
          %119 = sbr.rel (%p117) target = $region28
        $region27: #{tpu_custom_call.1} parent=23 // pred_region
          %120 = dma.done %s113, 6144
        $region28: #{tpu_custom_call.1} parent=23 // pred_fallthru
          _
        %s121 = sand.u32 %s26, 1
        %s122 = scalar_lea.sflag [#allocation3], %s121
        %s123 = sand.u32 %s26, 1
        %s124 = smul.addr %s123, 384
        %s125 = scalar_lea.vmem [#allocation2], %s124
        %p126 = pneg %p39
        %p127 = pneg %p36
        %p128 = pneg %p65
        %p129 = pneg %p62
        %s130 = sand.u32 %s52, 1
        %s131 = scalar_lea.sflag [#allocation4], %s130
        %s132 = sand.u32 %s52, 1
        %s133 = smul.addr %s132, 384
        %s134 = scalar_lea.vmem [#allocation5], %s133
        %s135 = smul.u32 48, %s18
        %s136 = smul.u32 48, %s18
        %v137 = vld [vmem:[%s116] sm:$0xff]
        %v138 = vld [vmem:[%s116 + $0x8] sm:$0xff]
        %v139 = vld [vmem:[%s116 + $0x10] sm:$0xff]
        %v140 = vld [vmem:[%s116 + $0x18] sm:$0xff]
        %v141 = vld [vmem:[%s116 + $0x20] sm:$0xff]
        %v142 = vld [vmem:[%s116 + $0x28] sm:$0xff]
        %v143 = vld [vmem:[%s116 + $0x30] sm:$0xff]
        %v144 = vld [vmem:[%s116 + $0x38] sm:$0xff]
        %v145 = vld [vmem:[%s116 + $0x40] sm:$0xff]
        %v146 = vld [vmem:[%s116 + $0x48] sm:$0xff]
        %v147 = vld [vmem:[%s116 + $0x50] sm:$0xff]
        %v148 = vld [vmem:[%s116 + $0x58] sm:$0xff]
        %v149 = vld [vmem:[%s116 + $0x60] sm:$0xff]
        %v150 = vld [vmem:[%s116 + $0x68] sm:$0xff]
        %v151 = vld [vmem:[%s116 + $0x70] sm:$0xff]
        %v152 = vld [vmem:[%s116 + $0x78] sm:$0xff]
        %v153 = vld [vmem:[%s116 + $0x80] sm:$0xff]
        %v154 = vld [vmem:[%s116 + $0x88] sm:$0xff]
        %v155 = vld [vmem:[%s116 + $0x90] sm:$0xff]
        %v156 = vld [vmem:[%s116 + $0x98] sm:$0xff]
        %v157 = vld [vmem:[%s116 + $0xa0] sm:$0xff]
        %v158 = vld [vmem:[%s116 + $0xa8] sm:$0xff]
        %v159 = vld [vmem:[%s116 + $0xb0] sm:$0xff]
        %v160 = vld [vmem:[%s116 + $0xb8] sm:$0xff]
        %v161 = vld [vmem:[%s116 + $0xc0] sm:$0xff]
        %v162 = vld [vmem:[%s116 + $0xc8] sm:$0xff]
        %v163 = vld [vmem:[%s116 + $0xd0] sm:$0xff]
        %v164 = vld [vmem:[%s116 + $0xd8] sm:$0xff]
        %v165 = vld [vmem:[%s116 + $0xe0] sm:$0xff]
        %v166 = vld [vmem:[%s116 + $0xe8] sm:$0xff]
        %v167 = vld [vmem:[%s116 + $0xf0] sm:$0xff]
        %v168 = vld [vmem:[%s116 + $0xf8] sm:$0xff]
        %v169 = vld [vmem:[%s116 + $0x100] sm:$0xff]
        %v170 = vld [vmem:[%s116 + $0x108] sm:$0xff]
        %v171 = vld [vmem:[%s116 + $0x110] sm:$0xff]
        %v172 = vld [vmem:[%s116 + $0x118] sm:$0xff]
        %v173 = vld [vmem:[%s116 + $0x120] sm:$0xff]
        %v174 = vld [vmem:[%s116 + $0x128] sm:$0xff]
        %v175 = vld [vmem:[%s116 + $0x130] sm:$0xff]
        %v176 = vld [vmem:[%s116 + $0x138] sm:$0xff]
        %v177 = vld [vmem:[%s116 + $0x140] sm:$0xff]
        %v178 = vld [vmem:[%s116 + $0x148] sm:$0xff]
        %v179 = vld [vmem:[%s116 + $0x150] sm:$0xff]
        %v180 = vld [vmem:[%s116 + $0x158] sm:$0xff]
        %v181 = vld [vmem:[%s116 + $0x160] sm:$0xff]
        %v182 = vld [vmem:[%s116 + $0x168] sm:$0xff]
        %v183 = vld [vmem:[%s116 + $0x170] sm:$0xff]
        %v184 = vld [vmem:[%s116 + $0x178] sm:$0xff]
        %v185 = vadd.f32 %v137, 1e-06
        %v186 = vadd.f32 %v138, 1e-06
        %v187 = vadd.f32 %v139, 1e-06
        %v188 = vadd.f32 %v140, 1e-06
        %v189 = vadd.f32 %v141, 1e-06
        %v190 = vadd.f32 %v142, 1e-06
        %v191 = vadd.f32 %v143, 1e-06
        %v192 = vadd.f32 %v144, 1e-06
        %v193 = vadd.f32 %v145, 1e-06
        %v194 = vadd.f32 %v146, 1e-06
        %v195 = vadd.f32 %v147, 1e-06
        %v196 = vadd.f32 %v148, 1e-06
        %v197 = vadd.f32 %v149, 1e-06
        %v198 = vadd.f32 %v150, 1e-06
        %v199 = vadd.f32 %v151, 1e-06
        %v200 = vadd.f32 %v152, 1e-06
        %v201 = vadd.f32 %v153, 1e-06
        %v202 = vadd.f32 %v154, 1e-06
        %v203 = vadd.f32 %v155, 1e-06
        %v204 = vadd.f32 %v156, 1e-06
        %v205 = vadd.f32 %v157, 1e-06
        %v206 = vadd.f32 %v158, 1e-06
        %v207 = vadd.f32 %v159, 1e-06
        %v208 = vadd.f32 %v160, 1e-06
        %v209 = vadd.f32 %v161, 1e-06
        %v210 = vadd.f32 %v162, 1e-06
        %v211 = vadd.f32 %v163, 1e-06
        %v212 = vadd.f32 %v164, 1e-06
        %v213 = vadd.f32 %v165, 1e-06
        %v214 = vadd.f32 %v166, 1e-06
        %v215 = vadd.f32 %v167, 1e-06
        %v216 = vadd.f32 %v168, 1e-06
        %v217 = vadd.f32 %v169, 1e-06
        %v218 = vadd.f32 %v170, 1e-06
        %v219 = vadd.f32 %v171, 1e-06
        %v220 = vadd.f32 %v172, 1e-06
        %v221 = vadd.f32 %v173, 1e-06
        %v222 = vadd.f32 %v174, 1e-06
        %v223 = vadd.f32 %v175, 1e-06
        %v224 = vadd.f32 %v176, 1e-06
        %v225 = vadd.f32 %v177, 1e-06
        %v226 = vadd.f32 %v178, 1e-06
        %v227 = vadd.f32 %v179, 1e-06
        %v228 = vadd.f32 %v180, 1e-06
        %v229 = vadd.f32 %v181, 1e-06
        %v230 = vadd.f32 %v182, 1e-06
        %v231 = vadd.f32 %v183, 1e-06
        %v232 = vadd.f32 %v184, 1e-06
        %v233 = vlog2.pop %v185
        %v234 = vmul.f32 %v233, 0.6931472
        %v235 = vlog2.pop %v186
        %v236 = vmul.f32 %v235, 0.6931472
        %v237 = vlog2.pop %v187
        %v238 = vmul.f32 %v237, 0.6931472
        %v239 = vlog2.pop %v188
        %v240 = vmul.f32 %v239, 0.6931472
        %v241 = vlog2.pop %v189
        %v242 = vmul.f32 %v241, 0.6931472
        %v243 = vlog2.pop %v190
        %v244 = vmul.f32 %v243, 0.6931472
        %v245 = vlog2.pop %v191
        %v246 = vmul.f32 %v245, 0.6931472
        %v247 = vlog2.pop %v192
        %v248 = vmul.f32 %v247, 0.6931472
        %v249 = vlog2.pop %v193
        %v250 = vmul.f32 %v249, 0.6931472
        %v251 = vlog2.pop %v194
        %v252 = vmul.f32 %v251, 0.6931472
        %v253 = vlog2.pop %v195
        %v254 = vmul.f32 %v253, 0.6931472
        %v255 = vlog2.pop %v196
        %v256 = vmul.f32 %v255, 0.6931472
        %v257 = vlog2.pop %v197
        %v258 = vmul.f32 %v257, 0.6931472
        %v259 = vlog2.pop %v198
        %v260 = vmul.f32 %v259, 0.6931472
        %v261 = vlog2.pop %v199
        %v262 = vmul.f32 %v261, 0.6931472
        %v263 = vlog2.pop %v200
        %v264 = vmul.f32 %v263, 0.6931472
        %v265 = vlog2.pop %v201
        %v266 = vmul.f32 %v265, 0.6931472
        %v267 = vlog2.pop %v202
        %v268 = vmul.f32 %v267, 0.6931472
        %v269 = vlog2.pop %v203
        %v270 = vmul.f32 %v269, 0.6931472
        %v271 = vlog2.pop %v204
        %v272 = vmul.f32 %v271, 0.6931472
        %v273 = vlog2.pop %v205
        %v274 = vmul.f32 %v273, 0.6931472
        %v275 = vlog2.pop %v206
        %v276 = vmul.f32 %v275, 0.6931472
        %v277 = vlog2.pop %v207
        %v278 = vmul.f32 %v277, 0.6931472
        %v279 = vlog2.pop %v208
        %v280 = vmul.f32 %v279, 0.6931472
        %v281 = vlog2.pop %v209
        %v282 = vmul.f32 %v281, 0.6931472
        %v283 = vlog2.pop %v210
        %v284 = vmul.f32 %v283, 0.6931472
        %v285 = vlog2.pop %v211
        %v286 = vmul.f32 %v285, 0.6931472
        %v287 = vlog2.pop %v212
        %v288 = vmul.f32 %v287, 0.6931472
        %v289 = vlog2.pop %v213
        %v290 = vmul.f32 %v289, 0.6931472
        %v291 = vlog2.pop %v214
        %v292 = vmul.f32 %v291, 0.6931472
        %v293 = vlog2.pop %v215
        %v294 = vmul.f32 %v293, 0.6931472
        %v295 = vlog2.pop %v216
        %v296 = vmul.f32 %v295, 0.6931472
        %v297 = vlog2.pop %v217
        %v298 = vmul.f32 %v297, 0.6931472
        %v299 = vlog2.pop %v218
        %v300 = vmul.f32 %v299, 0.6931472
        %v301 = vlog2.pop %v219
        %v302 = vmul.f32 %v301, 0.6931472
        %v303 = vlog2.pop %v220
        %v304 = vmul.f32 %v303, 0.6931472
        %v305 = vlog2.pop %v221
        %v306 = vmul.f32 %v305, 0.6931472
        %v307 = vlog2.pop %v222
        %v308 = vmul.f32 %v307, 0.6931472
        %v309 = vlog2.pop %v223
        %v310 = vmul.f32 %v309, 0.6931472
        %v311 = vlog2.pop %v224
        %v312 = vmul.f32 %v311, 0.6931472
        %v313 = vlog2.pop %v225
        %v314 = vmul.f32 %v313, 0.6931472
        %v315 = vlog2.pop %v226
        %v316 = vmul.f32 %v315, 0.6931472
        %v317 = vlog2.pop %v227
        %v318 = vmul.f32 %v317, 0.6931472
        %v319 = vlog2.pop %v228
        %v320 = vmul.f32 %v319, 0.6931472
        %v321 = vlog2.pop %v229
        %v322 = vmul.f32 %v321, 0.6931472
        %v323 = vlog2.pop %v230
        %v324 = vmul.f32 %v323, 0.6931472
        %v325 = vlog2.pop %v231
        %v326 = vmul.f32 %v325, 0.6931472
        %v327 = vlog2.pop %v232
        %v328 = vmul.f32 %v327, 0.6931472
        %329 = vst [vmem:[%s134] sm:$0xff] %v234
        %330 = vst [vmem:[%s134 + $0x8] sm:$0xff] %v236
        %331 = vst [vmem:[%s134 + $0x10] sm:$0xff] %v238
        %332 = vst [vmem:[%s134 + $0x18] sm:$0xff] %v240
        %333 = vst [vmem:[%s134 + $0x20] sm:$0xff] %v242
        %334 = vst [vmem:[%s134 + $0x28] sm:$0xff] %v244
        %335 = vst [vmem:[%s134 + $0x30] sm:$0xff] %v246
        %336 = vst [vmem:[%s134 + $0x38] sm:$0xff] %v248
        %337 = vst [vmem:[%s134 + $0x40] sm:$0xff] %v250
        %338 = vst [vmem:[%s134 + $0x48] sm:$0xff] %v252
        %339 = vst [vmem:[%s134 + $0x50] sm:$0xff] %v254
        %340 = vst [vmem:[%s134 + $0x58] sm:$0xff] %v256
        %341 = vst [vmem:[%s134 + $0x60] sm:$0xff] %v258
        %342 = vst [vmem:[%s134 + $0x68] sm:$0xff] %v260
        %343 = vst [vmem:[%s134 + $0x70] sm:$0xff] %v262
        %344 = vst [vmem:[%s134 + $0x78] sm:$0xff] %v264
        %345 = vst [vmem:[%s134 + $0x80] sm:$0xff] %v266
        %346 = vst [vmem:[%s134 + $0x88] sm:$0xff] %v268
        %347 = vst [vmem:[%s134 + $0x90] sm:$0xff] %v270
        %348 = vst [vmem:[%s134 + $0x98] sm:$0xff] %v272
        %349 = vst [vmem:[%s134 + $0xa0] sm:$0xff] %v274
        %350 = vst [vmem:[%s134 + $0xa8] sm:$0xff] %v276
        %351 = vst [vmem:[%s134 + $0xb0] sm:$0xff] %v278
        %352 = vst [vmem:[%s134 + $0xb8] sm:$0xff] %v280
        %353 = vst [vmem:[%s134 + $0xc0] sm:$0xff] %v282
        %354 = vst [vmem:[%s134 + $0xc8] sm:$0xff] %v284
        %355 = vst [vmem:[%s134 + $0xd0] sm:$0xff] %v286
        %356 = vst [vmem:[%s134 + $0xd8] sm:$0xff] %v288
        %357 = vst [vmem:[%s134 + $0xe0] sm:$0xff] %v290
        %358 = vst [vmem:[%s134 + $0xe8] sm:$0xff] %v292
        %359 = vst [vmem:[%s134 + $0xf0] sm:$0xff] %v294
        %360 = vst [vmem:[%s134 + $0xf8] sm:$0xff] %v296
        %361 = vst [vmem:[%s134 + $0x100] sm:$0xff] %v298
        %362 = vst [vmem:[%s134 + $0x108] sm:$0xff] %v300
        %363 = vst [vmem:[%s134 + $0x110] sm:$0xff] %v302
        %364 = vst [vmem:[%s134 + $0x118] sm:$0xff] %v304
        %365 = vst [vmem:[%s134 + $0x120] sm:$0xff] %v306
        %366 = vst [vmem:[%s134 + $0x128] sm:$0xff] %v308
        %367 = vst [vmem:[%s134 + $0x130] sm:$0xff] %v310
        %368 = vst [vmem:[%s134 + $0x138] sm:$0xff] %v312
        %369 = vst [vmem:[%s134 + $0x140] sm:$0xff] %v314
        %370 = vst [vmem:[%s134 + $0x148] sm:$0xff] %v316
        %371 = vst [vmem:[%s134 + $0x150] sm:$0xff] %v318
        %372 = vst [vmem:[%s134 + $0x158] sm:$0xff] %v320
        %373 = vst [vmem:[%s134 + $0x160] sm:$0xff] %v322
        %374 = vst [vmem:[%s134 + $0x168] sm:$0xff] %v324
        %375 = vst [vmem:[%s134 + $0x170] sm:$0xff] %v326
        %376 = vst [vmem:[%s134 + $0x178] sm:$0xff] %v328
        %s377 = sand.u32 %s52, 1
        %s378 = scalar_lea.sflag [#allocation4], %s377
        %s379 = sand.u32 %s52, 1
        %s380 = smul.addr %s379, 384
        %s381 = scalar_lea.vmem [#allocation5], %s380
        // Predicated region
        $region29: #{tpu_custom_call.1} parent=23 // pred_check
          %p382 = pneg %p62
        $region30: #{tpu_custom_call.1} parent=23 // pred_check_branch
          %384 = sbr.rel (%p382) target = $region32
        $region31: #{tpu_custom_call.1} parent=23 // pred_region
          %s385 = smul.u32 48, %s18
          %s387 = ssub.s32 6144, 6144
          %388 = vsyncadd %s378, %s387
          %s389 = smul.addr %s385, 128
          %s390 = scalar_lea.hbm %s1, %s389
          %s391 = sshll.u32 %s381, 4
          %s392 = int_to_ptr.vmem [resolvable:$true] %s391
          %397 = dma.vmem_to_hbm [thread:$0]  %s392, 6144, %s390, %s378, 128, 128, 8
        $region32: #{tpu_custom_call.1} parent=23 // pred_fallthru
          _
      $region24: #{tpu_custom_call.1} parent=5 // pred_fallthru
        _
      %p398 = scmp.le.s32.totalorder 2, %s13
      // Predicated region
      $region33: #{tpu_custom_call.1} parent=5 // pred_check
        %p399 = pneg %p398
      $region34: #{tpu_custom_call.1} parent=5 // pred_check_branch
        %401 = sbr.rel (%p399) target = $region36
      $region35: #{tpu_custom_call.1} parent=5 // pred_region
        %s402 = ssub.s32 %s13, 2
        // Predicated region
        $region37: #{tpu_custom_call.1} parent=35 // pred_check
          %p403 = pneg %p68
        $region38: #{tpu_custom_call.1} parent=35 // pred_check_branch
          %405 = sbr.rel (%p403) target = $region40
        $region39: #{tpu_custom_call.1} parent=35 // pred_region
          %s406 = sand.u32 %s53, 1
          %s407 = scalar_lea.sflag [#allocation4], %s406
          %s408 = sand.u32 %s53, 1
          %s409 = smul.addr %s408, 384
          %s410 = scalar_lea.vmem [#allocation5], %s409
          %411 = dma.done %s407, 6144
        $region40: #{tpu_custom_call.1} parent=35 // pred_fallthru
          _
      $region36: #{tpu_custom_call.1} parent=5 // pred_fallthru
        _
    $region6: #{tpu_custom_call.1} parent=1 // loop_footer
      %s17 = sadd.s32 1, %s13
    $region7: #{tpu_custom_call.1} parent=1 // loop_footer_branch
      %12 = sbr.rel target = $region3
    $region8: #{tpu_custom_call.1} parent=1 // loop_exit
      _
    %412 = vsyncpa [#allocation3], 1
    %s413 = scalar_lea.sflag [#allocation3], 1
    %414 = vsyncpa %s413, 1
    %415 = vsyncpa [#allocation4], 1
    %s416 = scalar_lea.sflag [#allocation4], 1
    %417 = vsyncpa %s416, 1

</llo_original>
